<compile_context>
chip_gen: v6e
topology: v6e:2x2x1
jax: 0.10.0
libtpu: 0.0.40
codegen_flags: <defaults>
</compile_context>

<pallas_src>
import functools

import jax
import jax.numpy as jnp
from jax.experimental import pallas as pl
from jax.experimental.pallas import tpu as pltpu


def _mlp_policy_kernel(obs_ref, w1_ref, b1_ref, w2_ref, b2_ref, w3_ref, b3_ref,
                       mean_ref):
    wdt = w1_ref.dtype  # compute dtype of the streamed operands (bf16 by default)
    x = obs_ref[...]
    # dot accumulates in f32; bias-add and tanh in f32 (v5e VPU/EUP have no bf16).
    h = jnp.tanh(jnp.dot(x, w1_ref[...], preferred_element_type=jnp.float32)
                 + b1_ref[...])
    h = jnp.tanh(jnp.dot(h.astype(wdt), w2_ref[...],
                         preferred_element_type=jnp.float32) + b2_ref[...])
    mean_ref[...] = (jnp.dot(h.astype(wdt), w3_ref[...],
                             preferred_element_type=jnp.float32)
                     + b3_ref[...]).astype(mean_ref.dtype)


def _round_up(x, m):
    return ((x + m - 1) // m) * m


def _pick_batch_tile(batch, max_tile, min_split):
    """Whole batch in one step when small; otherwise >=2 tiles (multiple of 8)."""
    if batch <= min_split:
        # Block shape equals the full array -> no (8,128) alignment requirement,
        # single grid step, no per-step overhead amortization needed.
        return batch
    # >= 2 grid steps so both v7x TensorCores take a shard of the "parallel" axis;
    # tile is a multiple of 8 (sublane) and capped so lane-padded VMEM stays in budget.
    return min(max_tile, _round_up(pl.cdiv(batch, 2), 8))


@functools.partial(jax.jit, static_argnames=("max_batch_tile", "min_split"))
def mlp_policy_forward(obs, params, *, max_batch_tile=8192, min_split=2048):
    """Returns (mean, std) of the action distribution; mean computed in Pallas."""
    w1, b1, w2, b2, w3, b3, std = params
    B, ob_dim = obs.shape
    ac_dim = w3.shape[1]

    # Stream obs (dominant HBM traffic) and the tiny weights as bf16; biases stay f32.
    cdt = jnp.bfloat16
    obs_c = obs.astype(cdt)
    w1c, w2c, w3c = w1.astype(cdt), w2.astype(cdt), w3.astype(cdt)

    batch_tile = _pick_batch_tile(B, max_batch_tile, min_split)
    grid = (pl.cdiv(B, batch_tile),)  # boundary block (if ragged) is masked by Pallas

    def full(arr):
        return pl.BlockSpec(arr.shape, lambda i, _n=arr.ndim: (0,) * _n)

    mean = pl.pallas_call(
        _mlp_policy_kernel,
        grid=grid,
        in_specs=[
            pl.BlockSpec((batch_tile, ob_dim), lambda i: (i, 0)),   # obs tile
            full(w1c), full(b1),
            full(w2c), full(b2),
            full(w3c), full(b3),
        ],
        out_specs=pl.BlockSpec((batch_tile, ac_dim), lambda i: (i, 0)),  # mean tile
        out_shape=jax.ShapeDtypeStruct((B, ac_dim), jnp.float32),
        compiler_params=pltpu.CompilerParams(
            dimension_semantics=("parallel",),
            vmem_limit_bytes=32 * 1024 * 1024),
    )(obs_c, w1c, b1, w2c, b2, w3c, b3)

    # distributions.Normal(mean, std): std is a constant per-action-dim parameter;
    # broadcast outside the kernel (no redundant HBM writeback).
    std_b = jnp.broadcast_to(std, (B, ac_dim))
    return mean, std_b


def init_params(key, ob_dim, ac_dim, hidden):
    """Deterministic init of mean_net (2 hidden tanh layers) + std = 0.1."""
    ks = jax.random.split(key, 6)

    def lin(kw, kb, fan_in, fan_out):
        # torch nn.Linear default: U(-1/sqrt(fan_in), 1/sqrt(fan_in))
        bound = 1.0 / jnp.sqrt(fan_in)
        w = jax.random.uniform(kw, (fan_in, fan_out), jnp.float32, -bound, bound)
        b = jax.random.uniform(kb, (1, fan_out), jnp.float32, -bound, bound)
        return w, b

    w1, b1 = lin(ks[0], ks[1], ob_dim, hidden)
    w2, b2 = lin(ks[2], ks[3], hidden, hidden)
    w3, b3 = lin(ks[4], ks[5], hidden, ac_dim)
    std = jnp.ones((1, ac_dim), jnp.float32) * 0.1   # self._std = ones(ac_dim) * 0.1
    return (w1, b1, w2, b2, w3, b3, std)


def _reference_forward_matched(obs, params):
    """Reference with the same bf16 streaming / f32 accumulation as the kernel."""
    w1, b1, w2, b2, w3, b3, std = params
    cdt = jnp.bfloat16
    x = obs.astype(cdt)
    w1c, w2c, w3c = w1.astype(cdt), w2.astype(cdt), w3.astype(cdt)
    h = jnp.tanh(jnp.dot(x, w1c, preferred_element_type=jnp.float32) + b1)
    h = jnp.tanh(jnp.dot(h.astype(cdt), w2c, preferred_element_type=jnp.float32) + b2)
    mean = jnp.dot(h.astype(cdt), w3c, preferred_element_type=jnp.float32) + b3
    return mean, jnp.broadcast_to(std, mean.shape)


def _reference_forward_f32(obs, params):
    w1, b1, w2, b2, w3, b3, std = params
    h = jnp.tanh(obs @ w1 + b1)
    h = jnp.tanh(h @ w2 + b2)
    mean = h @ w3 + b3
    return mean, jnp.broadcast_to(std, mean.shape)


def _check(obs, params, **kw):
    mean, std = mlp_policy_forward(obs, params, **kw)
    jax.block_until_ready((mean, std))
    ref_mean, ref_std = _reference_forward_matched(obs, params)
    ref_mean32, _ = _reference_forward_f32(obs, params)
    B, ac_dim = ref_mean.shape
    assert mean.shape == (B, ac_dim) and std.shape == (B, ac_dim)
    assert mean.dtype == jnp.float32
    assert jnp.allclose(mean, ref_mean, atol=1e-4, rtol=1e-4), "mismatch vs matched ref"
    assert jnp.allclose(mean, ref_mean32, atol=2e-2, rtol=2e-2), "mismatch vs f32 ref"
    assert jnp.allclose(std, ref_std, atol=1e-6)
    return mean, std


if __name__ == "__main__":
    key = jax.random.PRNGKey(0)
    k_obs, k_obs2, k_obs3, k_params = jax.random.split(key, 4)

    OB_DIM, AC_DIM, HIDDEN = 16, 4, 32
    params = init_params(k_params, OB_DIM, AC_DIM, HIDDEN)

    # Small batch: single grid step (block == full array), no padding anywhere.
    obs = jax.random.normal(k_obs, (2, OB_DIM), jnp.float32)
    _check(obs, params)

    # Ragged batch forced onto the tiled path: 2 grid steps (tile=56), masked
    # boundary block, exercises the no-pad / no-slice ragged handling.
    obs2 = jax.random.normal(k_obs2, (100, OB_DIM), jnp.float32)
    _check(obs2, params, min_split=32)

    # Multi-step path with a tile cap: 5 grid steps of 64 rows, ragged last block.
    obs3 = jax.random.normal(k_obs3, (300, OB_DIM), jnp.float32)
    _check(obs3, params, max_batch_tile=64, min_split=32)

    # TODO(synk): discrete branch (Categorical(logits)) and nn_baseline head are
    # structurally identical MLPs; only the continuous stochastic branch is wired here.
    print("KERNEL_OK")
</pallas_src>

<mosaic_0001>
module attributes {stable_mosaic.version = 11 : i64} {
  func.func @_mlp_policy_kernel(%arg0: i32, %arg1: memref<2x16xbf16, #tpu.memory_space<vmem>>, %arg2: memref<16x32xbf16, #tpu.memory_space<vmem>>, %arg3: memref<1x32xf32, #tpu.memory_space<vmem>>, %arg4: memref<32x32xbf16, #tpu.memory_space<vmem>>, %arg5: memref<1x32xf32, #tpu.memory_space<vmem>>, %arg6: memref<32x4xbf16, #tpu.memory_space<vmem>>, %arg7: memref<1x4xf32, #tpu.memory_space<vmem>>, %arg8: memref<2x4xf32, #tpu.memory_space<vmem>>) attributes {dimension_semantics = [#tpu.dimension_semantics<parallel>], iteration_bounds = array<i64: 1>, scalar_prefetch = 0 : i64, scratch_operands = 0 : i64, tpu.core_type = #tpu.core_type<tc>, window_params = [{transform_indices = @transform_0, window_bounds = array<i64: 2, 16>}, {pipeline_mode = #tpu.pipeline_mode<synchronous>, transform_indices = @transform_1, window_bounds = array<i64: 16, 32>}, {pipeline_mode = #tpu.pipeline_mode<synchronous>, transform_indices = @transform_2, window_bounds = array<i64: 1, 32>}, {pipeline_mode = #tpu.pipeline_mode<synchronous>, transform_indices = @transform_3, window_bounds = array<i64: 32, 32>}, {pipeline_mode = #tpu.pipeline_mode<synchronous>, transform_indices = @transform_4, window_bounds = array<i64: 1, 32>}, {pipeline_mode = #tpu.pipeline_mode<synchronous>, transform_indices = @transform_5, window_bounds = array<i64: 32, 4>}, {pipeline_mode = #tpu.pipeline_mode<synchronous>, transform_indices = @transform_6, window_bounds = array<i64: 1, 4>}, {transform_indices = @transform_7, window_bounds = array<i64: 2, 4>}]} {
    %c0 = arith.constant 0 : index
    %c0_0 = arith.constant 0 : index
    %0 = vector.load %arg1[%c0, %c0_0] : memref<2x16xbf16, #tpu.memory_space<vmem>>, vector<2x16xbf16>
    %c0_1 = arith.constant 0 : index
    %c0_2 = arith.constant 0 : index
    %1 = vector.load %arg2[%c0_1, %c0_2] : memref<16x32xbf16, #tpu.memory_space<vmem>>, vector<16x32xbf16>
    %cst = arith.constant dense<0.000000e+00> : vector<2x32xf32>
    %2 = tpu.matmul %0, %1, %cst {dimension_numbers = #tpu.dot_dimension_numbers<[1], [0], [0], [1], [0, 0, 1, 1], [], []>} : vector<2x16xbf16>, vector<16x32xbf16>, vector<2x32xf32> -> vector<2x32xf32>
    %c0_3 = arith.constant 0 : index
    %c0_4 = arith.constant 0 : index
    %3 = vector.load %arg3[%c0_3, %c0_4] : memref<1x32xf32, #tpu.memory_space<vmem>>, vector<1x32xf32>
    %4 = vector.broadcast %3 : vector<1x32xf32> to vector<2x32xf32>
    %5 = arith.addf %2, %4 : vector<2x32xf32>
    %6 = math.tanh %5 : vector<2x32xf32>
    %7 = arith.truncf %6 : vector<2x32xf32> to vector<2x32xbf16>
    %c0_5 = arith.constant 0 : index
    %c0_6 = arith.constant 0 : index
    %8 = vector.load %arg4[%c0_5, %c0_6] : memref<32x32xbf16, #tpu.memory_space<vmem>>, vector<32x32xbf16>
    %cst_7 = arith.constant dense<0.000000e+00> : vector<2x32xf32>
    %9 = tpu.matmul %7, %8, %cst_7 {dimension_numbers = #tpu.dot_dimension_numbers<[1], [0], [0], [1], [0, 0, 1, 1], [], []>} : vector<2x32xbf16>, vector<32x32xbf16>, vector<2x32xf32> -> vector<2x32xf32>
    %c0_8 = arith.constant 0 : index
    %c0_9 = arith.constant 0 : index
    %10 = vector.load %arg5[%c0_8, %c0_9] : memref<1x32xf32, #tpu.memory_space<vmem>>, vector<1x32xf32>
    %11 = vector.broadcast %10 : vector<1x32xf32> to vector<2x32xf32>
    %12 = arith.addf %9, %11 : vector<2x32xf32>
    %13 = math.tanh %12 : vector<2x32xf32>
    %14 = arith.truncf %13 : vector<2x32xf32> to vector<2x32xbf16>
    %c0_10 = arith.constant 0 : index
    %c0_11 = arith.constant 0 : index
    %15 = vector.load %arg6[%c0_10, %c0_11] : memref<32x4xbf16, #tpu.memory_space<vmem>>, vector<32x4xbf16>
    %cst_12 = arith.constant dense<0.000000e+00> : vector<2x4xf32>
    %16 = tpu.matmul %14, %15, %cst_12 {dimension_numbers = #tpu.dot_dimension_numbers<[1], [0], [0], [1], [0, 0, 1, 1], [], []>} : vector<2x32xbf16>, vector<32x4xbf16>, vector<2x4xf32> -> vector<2x4xf32>
    %c0_13 = arith.constant 0 : index
    %c0_14 = arith.constant 0 : index
    %17 = vector.load %arg7[%c0_13, %c0_14] : memref<1x4xf32, #tpu.memory_space<vmem>>, vector<1x4xf32>
    %18 = vector.broadcast %17 : vector<1x4xf32> to vector<2x4xf32>
    %19 = arith.addf %16, %18 : vector<2x4xf32>
    %c0_15 = arith.constant 0 : index
    %c0_16 = arith.constant 0 : index
    %20 = vector.load %arg8[%c0_15, %c0_16] : memref<2x4xf32, #tpu.memory_space<vmem>>, vector<2x4xf32>
    tpu.vector_store %arg8[%c0_15, %c0_16], %19 {strides = array<i32>} : memref<2x4xf32, #tpu.memory_space<vmem>>, vector<2x4xf32>,
    return
  }
  func.func @transform_0(%arg0: i32) -> (i32, i32) {
    %c0_i32 = arith.constant 0 : i32
    %c0_i32_0 = arith.constant 0 : i32
    return %arg0, %c0_i32 : i32, i32
  }
  func.func @transform_1(%arg0: i32) -> (i32, i32) {
    %c0_i32 = arith.constant 0 : i32
    %c0_i32_0 = arith.constant 0 : i32
    %c0_i32_1 = arith.constant 0 : i32
    return %c0_i32, %c0_i32_0 : i32, i32
  }
  func.func @transform_2(%arg0: i32) -> (i32, i32) {
    %c0_i32 = arith.constant 0 : i32
    %c0_i32_0 = arith.constant 0 : i32
    %c0_i32_1 = arith.constant 0 : i32
    return %c0_i32, %c0_i32_0 : i32, i32
  }
  func.func @transform_3(%arg0: i32) -> (i32, i32) {
    %c0_i32 = arith.constant 0 : i32
    %c0_i32_0 = arith.constant 0 : i32
    %c0_i32_1 = arith.constant 0 : i32
    return %c0_i32, %c0_i32_0 : i32, i32
  }
  func.func @transform_4(%arg0: i32) -> (i32, i32) {
    %c0_i32 = arith.constant 0 : i32
    %c0_i32_0 = arith.constant 0 : i32
    %c0_i32_1 = arith.constant 0 : i32
    return %c0_i32, %c0_i32_0 : i32, i32
  }
  func.func @transform_5(%arg0: i32) -> (i32, i32) {
    %c0_i32 = arith.constant 0 : i32
    %c0_i32_0 = arith.constant 0 : i32
    %c0_i32_1 = arith.constant 0 : i32
    return %c0_i32, %c0_i32_0 : i32, i32
  }
  func.func @transform_6(%arg0: i32) -> (i32, i32) {
    %c0_i32 = arith.constant 0 : i32
    %c0_i32_0 = arith.constant 0 : i32
    %c0_i32_1 = arith.constant 0 : i32
    return %c0_i32, %c0_i32_0 : i32, i32
  }
  func.func @transform_7(%arg0: i32) -> (i32, i32) {
    %c0_i32 = arith.constant 0 : i32
    %c0_i32_0 = arith.constant 0 : i32
    return %arg0, %c0_i32 : i32, i32
  }
}

</mosaic_0001>

<llo_original>
// kernel: mlp_policy_forward.1
$region0: #{mlp_policy_forward.1}
  #allocation0 [shape = 'u32[]', space=smem, size = 0x4, offset = 0x4, fixed_abs, tag = 'smem constant byte address 0x4 - core index']
  #allocation1 [shape = 'u32[144,128]{1,0:T(1,128)}', space=vmem, size = 0x12000, scoped, tag = 'internal scratch']
  %s0 = inlined_call_operand.vmem [shape: bf16[2,16], index: 0, kind: input, shape index: {}]
  %s1 = inlined_call_operand.vmem [shape: bf16[16,32], index: 1, kind: input, shape index: {}]
  %s2 = inlined_call_operand.vmem [shape: f32[1,32], index: 2, kind: input, shape index: {}]
  %s3 = inlined_call_operand.vmem [shape: bf16[32,32], index: 3, kind: input, shape index: {}]
  %s4 = inlined_call_operand.vmem [shape: f32[1,32], index: 4, kind: input, shape index: {}]
  %s5 = inlined_call_operand.vmem [shape: bf16[32,4], index: 5, kind: input, shape index: {}]
  %s6 = inlined_call_operand.vmem [shape: f32[1,4], index: 6, kind: input, shape index: {}]
  %s7 = inlined_call_operand.hbm [shape: f32[2,4], index: 7, kind: output, shape index: {}]
  %s8 = sld [smem:[#allocation0]]
  $region38: #{mlp_policy_forward.1} parent=0
    _
  %s10 = ssub.s32 1, %s8
  %s11 = scalar_select 0, %s10, %s8
  $region1: #{mlp_policy_forward.1} parent=0
    #allocation2 [shape = 'u8[1024]{0}', space=vmem, size = 0x400, scoped, tag = 'output window, operand 0, single buffered']
    #allocation3 [shape = 's32[1]{0}', space=sflag, size = 0x4, scoped, tag = 'scoped memory for mlp_policy_forward.1']
    %12 = vsyncpa [#allocation3], 0
    // Predicated region
    $region2: #{mlp_policy_forward.1} parent=1 // pred_check
      _
    $region3: #{mlp_policy_forward.1} parent=1 // pred_check_branch
      %14 = sbr.rel (0) target = $region5
    $region4: #{mlp_policy_forward.1} parent=1 // pred_region
      _
    $region5: #{mlp_policy_forward.1} parent=1 // pred_fallthru
      _
    // Predicated region
    $region6: #{mlp_policy_forward.1} parent=1 // pred_check
      _
    $region7: #{mlp_policy_forward.1} parent=1 // pred_check_branch
      %16 = sbr.rel (0) target = $region9
    $region8: #{mlp_policy_forward.1} parent=1 // pred_region
      _
    $region9: #{mlp_policy_forward.1} parent=1 // pred_fallthru
      _
    // Predicated region
    $region10: #{mlp_policy_forward.1} parent=1 // pred_check
      _
    $region11: #{mlp_policy_forward.1} parent=1 // pred_check_branch
      %18 = sbr.rel (0) target = $region13
    $region12: #{mlp_policy_forward.1} parent=1 // pred_region
      _
    $region13: #{mlp_policy_forward.1} parent=1 // pred_fallthru
      _
    // Predicated region
    $region14: #{mlp_policy_forward.1} parent=1 // pred_check
      _
    $region15: #{mlp_policy_forward.1} parent=1 // pred_check_branch
      %20 = sbr.rel (0) target = $region17
    $region16: #{mlp_policy_forward.1} parent=1 // pred_region
      _
    $region17: #{mlp_policy_forward.1} parent=1 // pred_fallthru
      _
    // Predicated region
    $region18: #{mlp_policy_forward.1} parent=1 // pred_check
      _
    $region19: #{mlp_policy_forward.1} parent=1 // pred_check_branch
      %22 = sbr.rel (0) target = $region21
    $region20: #{mlp_policy_forward.1} parent=1 // pred_region
      _
    $region21: #{mlp_policy_forward.1} parent=1 // pred_fallthru
      _
    // Predicated region
    $region22: #{mlp_policy_forward.1} parent=1 // pred_check
      _
    $region23: #{mlp_policy_forward.1} parent=1 // pred_check_branch
      %24 = sbr.rel (0) target = $region25
    $region24: #{mlp_policy_forward.1} parent=1 // pred_region
      _
    $region25: #{mlp_policy_forward.1} parent=1 // pred_fallthru
      _
    // Predicated region
    $region26: #{mlp_policy_forward.1} parent=1 // pred_check
      _
    $region27: #{mlp_policy_forward.1} parent=1 // pred_check_branch
      %26 = sbr.rel (0) target = $region29
    $region28: #{mlp_policy_forward.1} parent=1 // pred_region
      _
    $region29: #{mlp_policy_forward.1} parent=1 // pred_fallthru
      _
    %v28 = vld [vmem:[%s0] sm:$0x1]
    %v29 = vld [vmem:[%s1] sm:$0xf]
    %v30 = vld [vmem:[%s1 + $0x4] sm:$0xf]
    %v31 = vld [vmem:[%s2] sm:$0x1]
    %v33 = vlaneseq
    %v34 = vshrl.u32 %v33, 7
    %v35 = vsub.s32 0, %v34
    %v36 = vrot.slane %v31, %v35
    %v40 = vunpack.c.l.b16 %v29
    %v41 = vunpack.c.l.b16 %v30
    %v42 = vpack.c.b16 %v41, %v40
    %vm44 = vcmask 130048
    %v46 = vsel %vm44, %v28, 0
    %48 = vmatprep.subr.bf16.mxu0 0
    %49 = vmatpush1.bf16.msra.mxu0 0
    %50 = vmatprep.subr.bf16.mxu0 0
    %51 = vmatpush1.bf16.msra.mxu0 0
    %52 = vmatprep.subr.bf16.mxu0 0
    %53 = vmatpush1.bf16.msra.mxu0 0
    %54 = vmatprep.subr.bf16.mxu0 0
    %55 = vmatpush1.bf16.msra.mxu0 0
    %56 = vmatprep.subr.bf16.mxu0 0
    %57 = vmatpush1.bf16.msra.mxu0 0
    %58 = vmatprep.subr.bf16.mxu0 0
    %59 = vmatpush1.bf16.msra.mxu0 0
    %60 = vmatprep.subr.bf16.mxu0 0
    %61 = vmatpush1.bf16.msra.mxu0 0
    %62 = vmatprep.subr.bf16.mxu0 0
    %63 = vmatpush1.bf16.msra.mxu0 %v42
    %64 = vmatprep.subr.bf16.mxu0 0
    %65 = vmatpush2.bf16.msra.mxu0 0
    %66 = vmatprep.subr.bf16.mxu0 0
    %67 = vmatpush2.bf16.msra.mxu0 0
    %68 = vmatprep.subr.bf16.mxu0 0
    %69 = vmatpush2.bf16.msra.mxu0 0
    %70 = vmatprep.subr.bf16.mxu0 0
    %71 = vmatpush2.bf16.msra.mxu0 0
    %72 = vmatprep.subr.bf16.mxu0 0
    %73 = vmatpush2.bf16.msra.mxu0 0
    %74 = vmatprep.subr.bf16.mxu0 0
    %75 = vmatpush2.bf16.msra.mxu0 0
    %76 = vmatprep.subr.bf16.mxu0 0
    %77 = vmatpush2.bf16.msra.mxu0 0
    %78 = vmatprep.subr.bf16.mxu0 0
    %79 = vmatpush2.bf16.msra.mxu0 0
    %80 = vmatprep.mubr.bf16.mxu0 0
    %81 = vmatmul.mubr.bf16.gmra.mxu0 %v46
    %v82 = vpop.f32.mrf.mxu0
    %v83 = vadd.f32 %v36, %v82
    %v84 = vpop.f32.mrf.mxu0
    %v85 = vpop.f32.mrf.mxu0
    %v86 = vpop.f32.mrf.mxu0
    %87 = vdwg.mxu0
    %v88 = vtanh.pop %v83
    %v89 = vpack.c.bf16 %v88, %v88
    %v90 = vld [vmem:[%s3] sm:$0xf]
    %v91 = vld [vmem:[%s3 + $0x4] sm:$0xf]
    %v92 = vld [vmem:[%s3 + $0x8] sm:$0xf]
    %v93 = vld [vmem:[%s3 + $0xc] sm:$0xf]
    %v94 = vld [vmem:[%s4] sm:$0x1]
    %v96 = vlaneseq
    %v97 = vshrl.u32 %v96, 7
    %v98 = vsub.s32 0, %v97
    %v99 = vrot.slane %v94, %v98
    %v105 = vunpack.c.l.b16 %v90
    %v106 = vunpack.c.l.b16 %v91
    %v107 = vunpack.c.l.b16 %v92
    %v108 = vunpack.c.l.b16 %v93
    %v109 = vpack.c.b16 %v106, %v105
    %v110 = vpack.c.b16 %v108, %v107
    %vm113 = vcmask 261120
    %v115 = vsel %vm113, %v89, 0
    %117 = vmatprep.subr.bf16.mxu0 0
    %118 = vmatpush1.bf16.msra.mxu0 0
    %119 = vmatprep.subr.bf16.mxu0 0
    %120 = vmatpush1.bf16.msra.mxu0 0
    %121 = vmatprep.subr.bf16.mxu0 0
    %122 = vmatpush1.bf16.msra.mxu0 0
    %123 = vmatprep.subr.bf16.mxu0 0
    %124 = vmatpush1.bf16.msra.mxu0 0
    %125 = vmatprep.subr.bf16.mxu0 0
    %126 = vmatpush1.bf16.msra.mxu0 0
    %127 = vmatprep.subr.bf16.mxu0 0
    %128 = vmatpush1.bf16.msra.mxu0 0
    %129 = vmatprep.subr.bf16.mxu0 0
    %130 = vmatpush1.bf16.msra.mxu0 %v110
    %131 = vmatprep.subr.bf16.mxu0 0
    %132 = vmatpush1.bf16.msra.mxu0 %v109
    %133 = vmatprep.subr.bf16.mxu0 0
    %134 = vmatpush2.bf16.msra.mxu0 0
    %135 = vmatprep.subr.bf16.mxu0 0
    %136 = vmatpush2.bf16.msra.mxu0 0
    %137 = vmatprep.subr.bf16.mxu0 0
    %138 = vmatpush2.bf16.msra.mxu0 0
    %139 = vmatprep.subr.bf16.mxu0 0
    %140 = vmatpush2.bf16.msra.mxu0 0
    %141 = vmatprep.subr.bf16.mxu0 0
    %142 = vmatpush2.bf16.msra.mxu0 0
    %143 = vmatprep.subr.bf16.mxu0 0
    %144 = vmatpush2.bf16.msra.mxu0 0
    %145 = vmatprep.subr.bf16.mxu0 0
    %146 = vmatpush2.bf16.msra.mxu0 0
    %147 = vmatprep.subr.bf16.mxu0 0
    %148 = vmatpush2.bf16.msra.mxu0 0
    %149 = vmatprep.mubr.bf16.mxu0 0
    %150 = vmatmul.mubr.bf16.gmra.mxu0 %v115
    %v151 = vpop.f32.mrf.mxu0
    %v152 = vadd.f32 %v99, %v151
    %v153 = vpop.f32.mrf.mxu0
    %v154 = vpop.f32.mrf.mxu0
    %v155 = vpop.f32.mrf.mxu0
    %156 = vdwg.mxu0
    %v157 = vtanh.pop %v152
    %v158 = vpack.c.bf16 %v157, %v157
    %v159 = vld [vmem:[%s5] sm:$0xf]
    %v160 = vld [vmem:[%s5 + $0x4] sm:$0xf]
    %v161 = vld [vmem:[%s5 + $0x8] sm:$0xf]
    %v162 = vld [vmem:[%s5 + $0xc] sm:$0xf]
    %v163 = vld [vmem:[%s6] sm:$0x1]
    %v165 = vlaneseq
    %v166 = vshrl.u32 %v165, 7
    %v167 = vsub.s32 0, %v166
    %v168 = vrot.slane %v163, %v167
    %v174 = vunpack.c.l.b16 %v159
    %v175 = vunpack.c.l.b16 %v160
    %v176 = vunpack.c.l.b16 %v161
    %v177 = vunpack.c.l.b16 %v162
    %v178 = vpack.c.b16 %v175, %v174
    %v179 = vpack.c.b16 %v177, %v176
    %v183 = vsel %vm113, %v158, 0
    %185 = vmatprep.subr.bf16.mxu0 0
    %186 = vmatpush1.bf16.msra.mxu0 0
    %187 = vmatprep.subr.bf16.mxu0 0
    %188 = vmatpush1.bf16.msra.mxu0 0
    %189 = vmatprep.subr.bf16.mxu0 0
    %190 = vmatpush1.bf16.msra.mxu0 0
    %191 = vmatprep.subr.bf16.mxu0 0
    %192 = vmatpush1.bf16.msra.mxu0 0
    %193 = vmatprep.subr.bf16.mxu0 0
    %194 = vmatpush1.bf16.msra.mxu0 0
    %195 = vmatprep.subr.bf16.mxu0 0
    %196 = vmatpush1.bf16.msra.mxu0 0
    %197 = vmatprep.subr.bf16.mxu0 0
    %198 = vmatpush1.bf16.msra.mxu0 %v179
    %199 = vmatprep.subr.bf16.mxu0 0
    %200 = vmatpush1.bf16.msra.mxu0 %v178
    %201 = vmatprep.subr.bf16.mxu0 0
    %202 = vmatpush2.bf16.msra.mxu0 0
    %203 = vmatprep.subr.bf16.mxu0 0
    %204 = vmatpush2.bf16.msra.mxu0 0
    %205 = vmatprep.subr.bf16.mxu0 0
    %206 = vmatpush2.bf16.msra.mxu0 0
    %207 = vmatprep.subr.bf16.mxu0 0
    %208 = vmatpush2.bf16.msra.mxu0 0
    %209 = vmatprep.subr.bf16.mxu0 0
    %210 = vmatpush2.bf16.msra.mxu0 0
    %211 = vmatprep.subr.bf16.mxu0 0
    %212 = vmatpush2.bf16.msra.mxu0 0
    %213 = vmatprep.subr.bf16.mxu0 0
    %214 = vmatpush2.bf16.msra.mxu0 0
    %215 = vmatprep.subr.bf16.mxu0 0
    %216 = vmatpush2.bf16.msra.mxu0 0
    %217 = vmatprep.mubr.bf16.mxu0 0
    %218 = vmatmul.mubr.bf16.gmra.mxu0 %v183
    %v219 = vpop.f32.mrf.mxu0
    %v220 = vadd.f32 %v168, %v219
    %v221 = vpop.f32.mrf.mxu0
    %v222 = vpop.f32.mrf.mxu0
    %v223 = vpop.f32.mrf.mxu0
    %224 = vdwg.mxu0
    %vm225 = vcmask 25600
    %226 = vst.msk [vmem:[#allocation2] sm:$0x3] %vm225, %v220
    // Predicated region
    $region30: #{mlp_policy_forward.1} parent=1 // pred_check
      _
    $region31: #{mlp_policy_forward.1} parent=1 // pred_check_branch
      %228 = sbr.rel (0) target = $region33
    $region32: #{mlp_policy_forward.1} parent=1 // pred_region
      %s230 = ssub.s32 32, 32
      %231 = vsyncadd [#allocation3], %s230
      %s233 = sshll.u32 [#allocation2], 4
      %s234 = int_to_ptr.vmem [resolvable:$true] %s233
      %236 = dma.vmem_to_hbm [thread:$0]  %s234, 32, %s7, [#allocation3]
    $region33: #{mlp_policy_forward.1} parent=1 // pred_fallthru
      _
    // Predicated region
    $region34: #{mlp_policy_forward.1} parent=1 // pred_check
      _
    $region35: #{mlp_policy_forward.1} parent=1 // pred_check_branch
      %238 = sbr.rel (0) target = $region37
    $region36: #{mlp_policy_forward.1} parent=1 // pred_region
      %239 = dma.done [#allocation3], 32
    $region37: #{mlp_policy_forward.1} parent=1 // pred_fallthru
      _
    %240 = vsyncpa [#allocation3], 1

</llo_original>
